<compile_context>
chip_gen: v7x
topology: tpu7x:2x2x1
jax: 0.10.0
libtpu: 0.0.40
codegen_flags: <defaults>
</compile_context>

<pallas_src>
import functools

import jax
import jax.numpy as jnp
from jax.experimental import pallas as pl
from jax.experimental.pallas import tpu as pltpu

_SUBLANE = 8            # second-to-last dim granularity
_MIN_SPLIT_ROWS = 256   # per-TC rows below which a megacore split isn't worth a grid step


def _round_up(n: int, m: int) -> int:
    return (n + m - 1) // m * m


def _pick_row_tile(b_padded: int, block_rows: int) -> int:
    """Row tile (multiple of 8).  Ensures >=2 blocks once the batch is large
    enough that splitting across v7x's two TensorCores beats the ~0.35us
    per-grid-step overhead; harmless on v5e/v6e."""
    if b_padded > block_rows:
        return block_rows
    if b_padded >= 2 * _MIN_SPLIT_ROWS:
        return _round_up((b_padded + 1) // 2, _SUBLANE)
    return b_padded


def linear_kernel(x_ref, w_ref, b_ref, o_ref):
    # One (TB, Din) row block of x against the resident (Din, Dout) weight:
    # MXU matmul with f32 accumulate, VPU bias broadcast-add.
    acc = jnp.dot(x_ref[...], w_ref[...], preferred_element_type=jnp.float32)
    o_ref[...] = (acc + b_ref[...]).astype(o_ref.dtype)


@functools.partial(jax.jit, static_argnames=("block_rows", "compute_dtype"))
def linear_pallas(x, w, b, *, block_rows: int = 1024, compute_dtype=None):
    """y = x @ w + b.

    x: (B, Din)   w: (Din, Dout)   b: (Dout,) or (1, Dout).
    (PyTorch stores nn.Linear weight as (out, in); pass it transposed as (in, out).)
    """
    B, Din = x.shape
    Din_w, Dout = w.shape
    assert Din == Din_w, "weight shape mismatch"
    out_dtype = x.dtype
    b2 = b.reshape(1, Dout)

    if compute_dtype is not None:          # e.g. jnp.bfloat16: v5e fast path
        x = x.astype(compute_dtype)
        w = w.astype(compute_dtype)
        b2 = b2.astype(jnp.float32)        # bias added in f32 regardless

    # Pad only the batch dim, only if needed (no-op at the nominal B=8).
    B_pad = _round_up(max(B, _SUBLANE), _SUBLANE)
    x_in = x if B_pad == B else jnp.pad(x, ((0, B_pad - B), (0, 0)))

    TB = _pick_row_tile(B_pad, block_rows)
    grid = (pl.cdiv(B_pad, TB),)

    out = pl.pallas_call(
        linear_kernel,
        out_shape=jax.ShapeDtypeStruct((B_pad, Dout), out_dtype),
        grid_spec=pl.GridSpec(
            grid=grid,
            in_specs=[
                # x: stream row blocks at native feature width (last dim == full dim).
                pl.BlockSpec((TB, Din), lambda i: (i, 0)),
                # weight: tiny, resident across the whole grid.
                pl.BlockSpec((Din, Dout), lambda i: (0, 0)),
                # bias: tiny, resident across the whole grid.
                pl.BlockSpec((1, Dout), lambda i: (0, 0)),
            ],
            out_specs=pl.BlockSpec((TB, Dout), lambda i: (i, 0)),
        ),
        compiler_params=pltpu.CompilerParams(
            # Row blocks are independent -> megacore sharding on v7x, harmless elsewhere.
            dimension_semantics=("parallel",),
            # Headroom only: footprint is a few KiB..MiB even at TB=2048,
            # far under v7x's 64 MiB physical / 32 MiB scoped VMEM.
            vmem_limit_bytes=32 * 1024 * 1024,
        ),
    )(x_in, w, b2)

    return out if B_pad == B else out[:B]


if __name__ == "__main__":
    key = jax.random.PRNGKey(0)
    k_x, k_w, k_b = jax.random.split(key, 3)

    batch, in_features, out_features = 8, 10, 10

    # Deterministic init mimicking nn.Linear's uniform(-1/sqrt(fan_in), 1/sqrt(fan_in)).
    bound = 1.0 / jnp.sqrt(jnp.float32(in_features))
    w = jax.random.uniform(k_w, (in_features, out_features), jnp.float32, -bound, bound)
    b = jax.random.uniform(k_b, (out_features,), jnp.float32, -bound, bound)
    x = jax.random.normal(k_x, (batch, in_features), jnp.float32)

    y = linear_pallas(x, w, b)
    jax.block_until_ready(y)

    # Correctness check against plain JAX reference.
    y_ref = x @ w + b[None, :]
    assert y.shape == y_ref.shape, "shape mismatch vs reference"
    assert jnp.allclose(y, y_ref, atol=1e-5, rtol=1e-5), "mismatch vs reference"

    print("KERNEL_OK")
</pallas_src>

<mosaic_0001>
module attributes {stable_mosaic.version = 11 : i64} {
  func.func @linear_kernel(%arg0: i32, %arg1: memref<8x10xf32, #tpu.memory_space<vmem>>, %arg2: memref<10x10xf32, #tpu.memory_space<vmem>>, %arg3: memref<1x10xf32, #tpu.memory_space<vmem>>, %arg4: memref<8x10xf32, #tpu.memory_space<vmem>>) attributes {dimension_semantics = [#tpu.dimension_semantics<parallel>], iteration_bounds = array<i64: 1>, scalar_prefetch = 0 : i64, scratch_operands = 0 : i64, tpu.core_type = #tpu.core_type<tc>, window_params = [{transform_indices = @transform_0, window_bounds = array<i64: 8, 10>}, {pipeline_mode = #tpu.pipeline_mode<synchronous>, transform_indices = @transform_1, window_bounds = array<i64: 10, 10>}, {pipeline_mode = #tpu.pipeline_mode<synchronous>, transform_indices = @transform_2, window_bounds = array<i64: 1, 10>}, {transform_indices = @transform_3, window_bounds = array<i64: 8, 10>}]} {
    %c0 = arith.constant 0 : index
    %c0_0 = arith.constant 0 : index
    %0 = vector.load %arg1[%c0, %c0_0] : memref<8x10xf32, #tpu.memory_space<vmem>>, vector<8x10xf32>
    %c0_1 = arith.constant 0 : index
    %c0_2 = arith.constant 0 : index
    %1 = vector.load %arg2[%c0_1, %c0_2] : memref<10x10xf32, #tpu.memory_space<vmem>>, vector<10x10xf32>
    %cst = arith.constant dense<0.000000e+00> : vector<8x10xf32>
    %2 = tpu.matmul %0, %1, %cst {dimension_numbers = #tpu.dot_dimension_numbers<[1], [0], [0], [1], [0, 0, 1, 1], [], []>} : vector<8x10xf32>, vector<10x10xf32>, vector<8x10xf32> -> vector<8x10xf32>
    %c0_3 = arith.constant 0 : index
    %c0_4 = arith.constant 0 : index
    %3 = vector.load %arg3[%c0_3, %c0_4] : memref<1x10xf32, #tpu.memory_space<vmem>>, vector<1x10xf32>
    %4 = vector.broadcast %3 : vector<1x10xf32> to vector<8x10xf32>
    %5 = arith.addf %2, %4 : vector<8x10xf32>
    %c0_5 = arith.constant 0 : index
    %c0_6 = arith.constant 0 : index
    %6 = vector.load %arg4[%c0_5, %c0_6] : memref<8x10xf32, #tpu.memory_space<vmem>>, vector<8x10xf32>
    tpu.vector_store %arg4[%c0_5, %c0_6], %5 {strides = array<i32>} : memref<8x10xf32, #tpu.memory_space<vmem>>, vector<8x10xf32>,
    return
  }
  func.func @transform_0(%arg0: i32) -> (i32, i32) {
    %c0_i32 = arith.constant 0 : i32
    %c0_i32_0 = arith.constant 0 : i32
    return %arg0, %c0_i32 : i32, i32
  }
  func.func @transform_1(%arg0: i32) -> (i32, i32) {
    %c0_i32 = arith.constant 0 : i32
    %c0_i32_0 = arith.constant 0 : i32
    %c0_i32_1 = arith.constant 0 : i32
    return %c0_i32, %c0_i32_0 : i32, i32
  }
  func.func @transform_2(%arg0: i32) -> (i32, i32) {
    %c0_i32 = arith.constant 0 : i32
    %c0_i32_0 = arith.constant 0 : i32
    %c0_i32_1 = arith.constant 0 : i32
    return %c0_i32, %c0_i32_0 : i32, i32
  }
  func.func @transform_3(%arg0: i32) -> (i32, i32) {
    %c0_i32 = arith.constant 0 : i32
    %c0_i32_0 = arith.constant 0 : i32
    return %arg0, %c0_i32 : i32, i32
  }
}

</mosaic_0001>

<llo_original>
// kernel: linear_pallas.1
$region0: #{linear_pallas.1}
  #allocation0 [shape = 'u32[]', space=smem, size = 0x4, offset = 0x4, fixed_abs, tag = 'smem constant byte address 0x4 - core index']
  #allocation1 [shape = 'u32[144,128]{1,0:T(1,128)}', space=vmem, size = 0x12000, scoped, tag = 'internal scratch']
  %s0 = inlined_call_operand.hbm [shape: f32[8,10], index: 0, kind: input, shape index: {}]
  %s1 = inlined_call_operand.hbm [shape: f32[10,10], index: 1, kind: input, shape index: {}]
  %s2 = inlined_call_operand.vmem [shape: f32[1,10], index: 2, kind: input, shape index: {}]
  %s3 = inlined_call_operand.hbm [shape: f32[8,10], index: 3, kind: output, shape index: {}]
  %s4 = sld [smem:[#allocation0]]
  $region30: #{linear_pallas.1} parent=0
    _
  %s6 = ssub.s32 1, %s4
  %s7 = scalar_select 0, %s6, %s4
  $region1: #{linear_pallas.1} parent=0
    #allocation2 [shape = 'u8[4096]{0}', space=vmem, size = 0x1000, scoped, tag = 'input window, operand 0, single buffered']
    #allocation3 [shape = 's32[1]{0}', space=sflag, size = 0x4, scoped, tag = 'scoped memory for linear_pallas.1']
    #allocation4 [shape = 's32[1]{0}', space=sflag, size = 0x4, scoped, tag = 'scoped memory for linear_pallas.1']
    #allocation5 [shape = 'u8[8192]{0}', space=vmem, size = 0x2000, scoped, tag = 'input window, operand 1, single buffered']
    #allocation6 [shape = 's32[1]{0}', space=sflag, size = 0x4, scoped, tag = 'scoped memory for linear_pallas.1']
    #allocation7 [shape = 'u8[4096]{0}', space=vmem, size = 0x1000, scoped, tag = 'output window, operand 0, single buffered']
    %8 = vsyncpa [#allocation3], 0
    %9 = vsyncpa [#allocation6], 0
    %10 = vsyncpa [#allocation4], 0
    // Predicated region
    $region2: #{linear_pallas.1} parent=1 // pred_check
      _
    $region3: #{linear_pallas.1} parent=1 // pred_check_branch
      %12 = sbr.rel (0) target = $region5
    $region4: #{linear_pallas.1} parent=1 // pred_region
      %s14 = ssub.s32 128, 128
      %15 = vsyncadd [#allocation3], %s14
      %s17 = sshll.u32 [#allocation2], 4
      %s18 = int_to_ptr.vmem [resolvable:$true] %s17
      %20 = dma.hbm_to_vmem [thread:$0]  %s0, 128, %s18, [#allocation3]
    $region5: #{linear_pallas.1} parent=1 // pred_fallthru
      _
    // Predicated region
    $region6: #{linear_pallas.1} parent=1 // pred_check
      _
    $region7: #{linear_pallas.1} parent=1 // pred_check_branch
      %22 = sbr.rel (0) target = $region9
    $region8: #{linear_pallas.1} parent=1 // pred_region
      %s24 = ssub.s32 256, 256
      %25 = vsyncadd [#allocation6], %s24
      %s26 = sshll.u32 [#allocation5], 4
      %s27 = int_to_ptr.vmem [resolvable:$true] %s26
      %32 = dma.hbm_to_vmem [thread:$0]  %s1, 256, %s27, [#allocation6], 128, 128, 8
    $region9: #{linear_pallas.1} parent=1 // pred_fallthru
      _
    // Predicated region
    $region10: #{linear_pallas.1} parent=1 // pred_check
      _
    $region11: #{linear_pallas.1} parent=1 // pred_check_branch
      %34 = sbr.rel (0) target = $region13
    $region12: #{linear_pallas.1} parent=1 // pred_region
      _
    $region13: #{linear_pallas.1} parent=1 // pred_fallthru
      _
    // Predicated region
    $region14: #{linear_pallas.1} parent=1 // pred_check
      _
    $region15: #{linear_pallas.1} parent=1 // pred_check_branch
      %36 = sbr.rel (0) target = $region17
    $region16: #{linear_pallas.1} parent=1 // pred_region
      %37 = dma.done [#allocation3], 128
    $region17: #{linear_pallas.1} parent=1 // pred_fallthru
      _
    // Predicated region
    $region18: #{linear_pallas.1} parent=1 // pred_check
      _
    $region19: #{linear_pallas.1} parent=1 // pred_check_branch
      %39 = sbr.rel (0) target = $region21
    $region20: #{linear_pallas.1} parent=1 // pred_region
      %40 = dma.done [#allocation6], 256
    $region21: #{linear_pallas.1} parent=1 // pred_fallthru
      _
    %v41 = vld [vmem:[#allocation2] sm:$0xff]
    %v42 = vld [vmem:[#allocation5] sm:$0xff]
    %v43 = vld [vmem:[#allocation5 + $0x8] sm:$0x3]
    %v44 = vld [vmem:[%s2] sm:$0x1]
    %v46 = vlaneseq
    %v47 = vshrl.u32 %v46, 7
    %v48 = vsub.s32 0, %v47
    %v49 = vrot.slane %v44, %v48
    %vm51 = vcmask 80896
    %v53 = vsel %vm51, %v41, 0
    %vm55 = vcmask 1041408
    %v57 = vsel %vm55, %v43, 0
    %59 = vmatprep.subr.mxu0 0.0
    %60 = vmatpush1.msra.mxu0 %v42
    %61 = vmatprep.subr.mxu0 0.0
    %62 = vmatpush1.msra.mxu0 %v57
    %63 = vmatprep.subr.mxu0 0.0
    %64 = vmatpush1.msra.mxu0 0.0
    %65 = vmatprep.subr.mxu0 0.0
    %66 = vmatpush1.msra.mxu0 0.0
    %67 = vmatprep.subr.mxu0 0.0
    %68 = vmatpush1.msra.mxu0 0.0
    %69 = vmatprep.subr.mxu0 0.0
    %70 = vmatpush1.msra.mxu0 0.0
    %71 = vmatprep.subr.mxu0 0.0
    %72 = vmatpush1.msra.mxu0 0.0
    %73 = vmatprep.subr.mxu0 0.0
    %74 = vmatpush1.msra.mxu0 0.0
    %75 = vmatprep.subr.mxu0 0.0
    %76 = vmatpush1.msra.mxu0 0.0
    %77 = vmatprep.subr.mxu0 0.0
    %78 = vmatpush1.msra.mxu0 0.0
    %79 = vmatprep.subr.mxu0 0.0
    %80 = vmatpush1.msra.mxu0 0.0
    %81 = vmatprep.subr.mxu0 0.0
    %82 = vmatpush1.msra.mxu0 0.0
    %83 = vmatprep.subr.mxu0 0.0
    %84 = vmatpush1.msra.mxu0 0.0
    %85 = vmatprep.subr.mxu0 0.0
    %86 = vmatpush1.msra.mxu0 0.0
    %87 = vmatprep.subr.mxu0 0.0
    %88 = vmatpush1.msra.mxu0 0.0
    %89 = vmatprep.subr.mxu0 0.0
    %90 = vmatpush1.msra.mxu0 0.0
    %91 = vmatprep.subr.mxu0 0.0
    %92 = vmatpush1.msra.mxu0 0.0
    %93 = vmatprep.subr.mxu0 0.0
    %94 = vmatpush1.msra.mxu0 0.0
    %95 = vmatprep.subr.mxu0 0.0
    %96 = vmatpush1.msra.mxu0 0.0
    %97 = vmatprep.subr.mxu0 0.0
    %98 = vmatpush1.msra.mxu0 0.0
    %99 = vmatprep.subr.mxu0 0.0
    %100 = vmatpush1.msra.mxu0 0.0
    %101 = vmatprep.subr.mxu0 0.0
    %102 = vmatpush1.msra.mxu0 0.0
    %103 = vmatprep.subr.mxu0 0.0
    %104 = vmatpush1.msra.mxu0 0.0
    %105 = vmatprep.subr.mxu0 0.0
    %106 = vmatpush1.msra.mxu0 0.0
    %107 = vmatprep.subr.mxu0 0.0
    %108 = vmatpush1.msra.mxu0 0.0
    %109 = vmatprep.subr.mxu0 0.0
    %110 = vmatpush1.msra.mxu0 0.0
    %111 = vmatprep.subr.mxu0 0.0
    %112 = vmatpush1.msra.mxu0 0.0
    %113 = vmatprep.subr.mxu0 0.0
    %114 = vmatpush1.msra.mxu0 0.0
    %115 = vmatprep.subr.mxu0 0.0
    %116 = vmatpush1.msra.mxu0 0.0
    %117 = vmatprep.subr.mxu0 0.0
    %118 = vmatpush1.msra.mxu0 0.0
    %119 = vmatprep.subr.mxu0 0.0
    %120 = vmatpush1.msra.mxu0 0.0
    %121 = vmatprep.subr.mxu0 0.0
    %122 = vmatpush1.msra.mxu0 0.0
    %123 = vmatprep.mubr.f32.mxu0 0.0
    %124 = vmatmul.mubr.f32.gmra.mrb[0].mxu0 %v53
    %v125 = vpop.f32.mrb[0].mxu0
    %v126 = vadd.f32 %v49, %v125
    %v127 = vpop.f32.mrb[0].mxu0
    %128 = vdwg.mxu0
    %129 = vst.msk [vmem:[#allocation7] sm:$0xff] %vm51, %v126
    // Predicated region
    $region22: #{linear_pallas.1} parent=1 // pred_check
      _
    $region23: #{linear_pallas.1} parent=1 // pred_check_branch
      %131 = sbr.rel (0) target = $region25
    $region24: #{linear_pallas.1} parent=1 // pred_region
      %s133 = ssub.s32 128, 128
      %134 = vsyncadd [#allocation4], %s133
      %s136 = sshll.u32 [#allocation7], 4
      %s137 = int_to_ptr.vmem [resolvable:$true] %s136
      %139 = dma.vmem_to_hbm [thread:$0]  %s137, 128, %s3, [#allocation4]
    $region25: #{linear_pallas.1} parent=1 // pred_fallthru
      _
    // Predicated region
    $region26: #{linear_pallas.1} parent=1 // pred_check
      _
    $region27: #{linear_pallas.1} parent=1 // pred_check_branch
      %141 = sbr.rel (0) target = $region29
    $region28: #{linear_pallas.1} parent=1 // pred_region
      %142 = dma.done [#allocation4], 128
    $region29: #{linear_pallas.1} parent=1 // pred_fallthru
      _
    %143 = vsyncpa [#allocation3], 1
    %144 = vsyncpa [#allocation6], 1
    %145 = vsyncpa [#allocation4], 1

</llo_original>
